<compile_context>
chip_gen: v5e
topology: v5e:2x2
jax: 0.10.0
libtpu: 0.0.40
codegen_flags: <defaults>
</compile_context>

<pallas_src>
import functools

import jax
import jax.numpy as jnp
from jax import lax
from jax.experimental import pallas as pl
from jax.experimental.pallas import tpu as pltpu


# ----------------------------------------------------------------------------
# Fused kernel: num_layers x (Linear -> ReLU -> Linear -> ReLU -> Linear -> +res)
# followed by LayerNorm.  One grid step handles a (TR, C) row block.
# ----------------------------------------------------------------------------
def _transition_kernel(x_ref, w_ref, b_ref, ln_w_ref, ln_b_ref, o_ref, *,
                       num_layers):
    s = x_ref[...].astype(jnp.float32)                    # (TR, C) f32 epilogue

    for l in range(num_layers):                           # static unroll (NL small)
        s0 = s
        h = s
        for j in range(3):
            w = w_ref[3 * l + j]                          # (C, C) bf16, resident
            b = b_ref[3 * l + j, :].astype(jnp.float32)   # (C,) per-layer bias read
            # bf16 x bf16 -> f32 on the MXU (native fast path on v5e/v6e/v7x).
            h = jnp.dot(h.astype(jnp.bfloat16), w,
                        preferred_element_type=jnp.float32) + b
            if j < 2:
                h = jnp.maximum(h, 0.0)                   # ReLU (VPU, f32)
        s = s0 + h                                        # residual (f32)

    # TODO(synk): nn.Dropout is identity at inference; training-mode dropout
    # (stateful PRNG mask + rescale) is not implemented here.

    # LayerNorm over the channel dim (PyTorch eps = 1e-5), one-pass moments.
    m1 = jnp.mean(s, axis=-1, keepdims=True)
    m2 = jnp.mean(s * s, axis=-1, keepdims=True)
    var = m2 - m1 * m1
    sn = (s - m1) * lax.rsqrt(var + 1e-5)
    sn = sn * ln_w_ref[...].astype(jnp.float32) + ln_b_ref[...].astype(jnp.float32)

    o_ref[...] = sn.astype(o_ref.dtype)


def structure_module_transition(s, weights, biases, ln_w, ln_b, *,
                                block_rows=1024):
    """Fused StructureModuleTransition forward (inference).

    s:       (..., C)
    weights: (num_layers, 3, C, C)  -- PRE-TRANSPOSED so that y = x @ W + b
             (i.e. torch Linear.weight.T); passing raw (out, in) weights is wrong.
    biases:  (num_layers, 3, C)
    ln_w, ln_b: (C,)
    """
    *lead, C = s.shape
    num_layers, three, c_in, c_out = weights.shape
    assert three == 3 and c_in == C and c_out == C, (
        "weights must be (num_layers, 3, C, C), pre-transposed so y = x @ W + b")
    assert biases.shape == (num_layers, 3, C)

    x = s.reshape(-1, C)
    R = x.shape[0]

    # ---- Row-tile selection -------------------------------------------------
    # Multiple of 16 (bf16 packs two rows per sublane), capped by row count.
    TR = min(block_rows, R)
    TR = max(16, (TR // 16) * 16)

    # Keep >= 2 grid steps when possible so the parallel row axis can shard
    # across v7x's 2 TensorCores.
    if pl.cdiv(R, TR) < 2 and R >= 32:
        TR = max(16, ((pl.cdiv(R, 2) + 15) // 16) * 16)

    # Clamp against a conservative VMEM budget (fits v5e 16 MiB-ish scoped and
    # the v7x 32 MiB scoped default without needing vmem_limit_bytes).
    weight_bytes = 3 * num_layers * C * C * 2              # bf16, single-buffered
    const_bytes = weight_bytes + 3 * num_layers * C * 4 + 2 * C * 4

    def _vmem_est(tr):
        # double-buffered in/out f32 tiles (4 * tile) + live f32 working tile slack
        return const_bytes + 6 * tr * C * 4

    VMEM_BUDGET = 24 * 1024 * 1024
    while TR > 16 and _vmem_est(TR) > VMEM_BUDGET:
        TR = max(16, ((TR // 2) // 16) * 16)

    grid_rows = pl.cdiv(R, TR)   # ragged trailing block handled by Pallas masking

    # Host-side prep: flatten layer axis; weights to bf16 for the MXU.
    w2 = weights.reshape(3 * num_layers, C, C).astype(jnp.bfloat16)
    b2 = biases.reshape(3 * num_layers, C).astype(jnp.float32)

    cost = pl.CostEstimate(
        flops=6 * num_layers * R * C * C,
        transcendentals=R,
        bytes_accessed=2 * R * C * 4 + weight_bytes
        + 3 * num_layers * C * 4 + 2 * C * 4,
    )

    out = pl.pallas_call(
        functools.partial(_transition_kernel, num_layers=num_layers),
        out_shape=jax.ShapeDtypeStruct((R, C), s.dtype),
        grid_spec=pltpu.PrefetchScalarGridSpec(
            num_scalar_prefetch=0,
            grid=(grid_rows,),
            in_specs=[
                # activations: pipelined row blocks
                pl.BlockSpec((TR, C), lambda i: (i, 0)),
                # grid-invariant operands: VMEM-resident, single-buffered
                pl.BlockSpec((3 * num_layers, C, C), lambda i: (0, 0, 0),
                             pipeline_mode=pl.Buffered(1)),
                pl.BlockSpec((3 * num_layers, C), lambda i: (0, 0),
                             pipeline_mode=pl.Buffered(1)),
                pl.BlockSpec((1, C), lambda i: (0, 0),
                             pipeline_mode=pl.Buffered(1)),
                pl.BlockSpec((1, C), lambda i: (0, 0),
                             pipeline_mode=pl.Buffered(1)),
            ],
            out_specs=pl.BlockSpec((TR, C), lambda i: (i, 0)),
        ),
        compiler_params=pltpu.CompilerParams(
            dimension_semantics=("parallel",),
        ),
        cost_estimate=cost,
    )(x, w2, b2, ln_w.reshape(1, C).astype(jnp.float32),
      ln_b.reshape(1, C).astype(jnp.float32))

    return out.reshape(*lead, C)


# ----------------------------------------------------------------------------
# Pure-JAX reference mirroring the PyTorch forward (dropout in eval mode),
# with the same bf16-at-the-MXU / f32-accumulate numerics as the kernel.
# ----------------------------------------------------------------------------
def reference(s, weights, biases, ln_w, ln_b):
    x = s.astype(jnp.float32)
    w_bf16 = weights.astype(jnp.bfloat16)
    num_layers = weights.shape[0]
    for l in range(num_layers):
        s0 = x
        h = x
        for j in range(3):
            h = jnp.dot(h.astype(jnp.bfloat16), w_bf16[l, j],
                        preferred_element_type=jnp.float32) + biases[l, j]
            if j < 2:
                h = jnp.maximum(h, 0.0)
        x = s0 + h
    mean = jnp.mean(x, axis=-1, keepdims=True)
    var = jnp.mean((x - mean) ** 2, axis=-1, keepdims=True)
    y = (x - mean) * jax.lax.rsqrt(var + 1e-5) * ln_w + ln_b
    return y.astype(s.dtype)


if __name__ == "__main__":
    B, N, C = 2, 8, 32          # batch, sequence, channels (real model: C=384)
    NUM_LAYERS = 2              # dropout_rate irrelevant at inference

    key = jax.random.PRNGKey(0)
    k_s, k_w, k_b, k_g = jax.random.split(key, 4)

    s = jax.random.normal(k_s, (B, N, C), jnp.float32)
    weights = jax.random.normal(k_w, (NUM_LAYERS, 3, C, C), jnp.float32) * 0.1
    biases = jax.random.normal(k_b, (NUM_LAYERS, 3, C), jnp.float32) * 0.1
    ln_w = 1.0 + 0.1 * jax.random.normal(k_g, (C,), jnp.float32)
    ln_b = jnp.zeros((C,), jnp.float32)

    out = structure_module_transition(s, weights, biases, ln_w, ln_b)
    out = jax.block_until_ready(out)

    ref = reference(s, weights, biases, ln_w, ln_b)
    assert out.shape == s.shape
    assert jnp.allclose(out, ref, atol=2e-3, rtol=2e-3), (
        float(jnp.max(jnp.abs(out - ref))))

    print("KERNEL_OK")
</pallas_src>

<mosaic_0001>
module attributes {stable_mosaic.version = 11 : i64} {
  func.func @_transition_kernel(%arg0: i32, %arg1: memref<16x32xf32, #tpu.memory_space<vmem>>, %arg2: memref<6x32x32xbf16, #tpu.memory_space<vmem>>, %arg3: memref<6x32xf32, #tpu.memory_space<vmem>>, %arg4: memref<1x32xf32, #tpu.memory_space<vmem>>, %arg5: memref<1x32xf32, #tpu.memory_space<vmem>>, %arg6: memref<16x32xf32, #tpu.memory_space<vmem>>) attributes {dimension_semantics = [#tpu.dimension_semantics<parallel>], iteration_bounds = array<i64: 1>, scalar_prefetch = 0 : i64, scratch_operands = 0 : i64, tpu.core_type = #tpu.core_type<tc>, window_params = [{transform_indices = @transform_0, window_bounds = array<i64: 16, 32>}, {pipeline_mode = #tpu.pipeline_mode<synchronous>, transform_indices = @transform_1, window_bounds = array<i64: 6, 32, 32>}, {pipeline_mode = #tpu.pipeline_mode<synchronous>, transform_indices = @transform_2, window_bounds = array<i64: 6, 32>}, {pipeline_mode = #tpu.pipeline_mode<synchronous>, transform_indices = @transform_3, window_bounds = array<i64: 1, 32>}, {pipeline_mode = #tpu.pipeline_mode<synchronous>, transform_indices = @transform_4, window_bounds = array<i64: 1, 32>}, {transform_indices = @transform_5, window_bounds = array<i64: 16, 32>}]} {
    %c0 = arith.constant 0 : index
    %c0_0 = arith.constant 0 : index
    %0 = vector.load %arg1[%c0, %c0_0] : memref<16x32xf32, #tpu.memory_space<vmem>>, vector<16x32xf32>
    %c0_1 = arith.constant 0 : index
    %c0_2 = arith.constant 0 : index
    %c0_3 = arith.constant 0 : index
    %1 = vector.load %arg2[%c0_1, %c0_2, %c0_3] : memref<6x32x32xbf16, #tpu.memory_space<vmem>>, vector<1x32x32xbf16>
    %2 = vector.shape_cast %1 : vector<1x32x32xbf16> to vector<32x32xbf16>
    %c0_4 = arith.constant 0 : index
    %c0_5 = arith.constant 0 : index
    %3 = vector.load %arg3[%c0_4, %c0_5] : memref<6x32xf32, #tpu.memory_space<vmem>>, vector<1x32xf32>
    %4 = vector.shape_cast %3 : vector<1x32xf32> to vector<32xf32>
    %5 = arith.truncf %0 : vector<16x32xf32> to vector<16x32xbf16>
    %cst = arith.constant dense<0.000000e+00> : vector<16x32xf32>
    %6 = tpu.matmul %5, %2, %cst {dimension_numbers = #tpu.dot_dimension_numbers<[1], [0], [0], [1], [0, 0, 1, 1], [], []>} : vector<16x32xbf16>, vector<32x32xbf16>, vector<16x32xf32> -> vector<16x32xf32>
    %7 = vector.shape_cast %4 : vector<32xf32> to vector<1x32xf32>
    %8 = vector.broadcast %7 : vector<1x32xf32> to vector<16x32xf32>
    %9 = arith.addf %6, %8 : vector<16x32xf32>
    %cst_6 = arith.constant 0.000000e+00 : f32
    %10 = vector.broadcast %cst_6 : f32 to vector<16x32xf32>
    %11 = arith.maximumf %9, %10 : vector<16x32xf32>
    %c1 = arith.constant 1 : index
    %c0_7 = arith.constant 0 : index
    %c0_8 = arith.constant 0 : index
    %12 = vector.load %arg2[%c1, %c0_7, %c0_8] : memref<6x32x32xbf16, #tpu.memory_space<vmem>>, vector<1x32x32xbf16>
    %13 = vector.shape_cast %12 : vector<1x32x32xbf16> to vector<32x32xbf16>
    %c1_9 = arith.constant 1 : index
    %c0_10 = arith.constant 0 : index
    %14 = vector.load %arg3[%c1_9, %c0_10] : memref<6x32xf32, #tpu.memory_space<vmem>>, vector<1x32xf32>
    %15 = vector.shape_cast %14 : vector<1x32xf32> to vector<32xf32>
    %16 = arith.truncf %11 : vector<16x32xf32> to vector<16x32xbf16>
    %cst_11 = arith.constant dense<0.000000e+00> : vector<16x32xf32>
    %17 = tpu.matmul %16, %13, %cst_11 {dimension_numbers = #tpu.dot_dimension_numbers<[1], [0], [0], [1], [0, 0, 1, 1], [], []>} : vector<16x32xbf16>, vector<32x32xbf16>, vector<16x32xf32> -> vector<16x32xf32>
    %18 = vector.shape_cast %15 : vector<32xf32> to vector<1x32xf32>
    %19 = vector.broadcast %18 : vector<1x32xf32> to vector<16x32xf32>
    %20 = arith.addf %17, %19 : vector<16x32xf32>
    %cst_12 = arith.constant 0.000000e+00 : f32
    %21 = vector.broadcast %cst_12 : f32 to vector<16x32xf32>
    %22 = arith.maximumf %20, %21 : vector<16x32xf32>
    %c2 = arith.constant 2 : index
    %c0_13 = arith.constant 0 : index
    %c0_14 = arith.constant 0 : index
    %23 = vector.load %arg2[%c2, %c0_13, %c0_14] : memref<6x32x32xbf16, #tpu.memory_space<vmem>>, vector<1x32x32xbf16>
    %24 = vector.shape_cast %23 : vector<1x32x32xbf16> to vector<32x32xbf16>
    %c2_15 = arith.constant 2 : index
    %c0_16 = arith.constant 0 : index
    %25 = vector.load %arg3[%c2_15, %c0_16] : memref<6x32xf32, #tpu.memory_space<vmem>>, vector<1x32xf32>
    %26 = vector.shape_cast %25 : vector<1x32xf32> to vector<32xf32>
    %27 = arith.truncf %22 : vector<16x32xf32> to vector<16x32xbf16>
    %cst_17 = arith.constant dense<0.000000e+00> : vector<16x32xf32>
    %28 = tpu.matmul %27, %24, %cst_17 {dimension_numbers = #tpu.dot_dimension_numbers<[1], [0], [0], [1], [0, 0, 1, 1], [], []>} : vector<16x32xbf16>, vector<32x32xbf16>, vector<16x32xf32> -> vector<16x32xf32>
    %29 = vector.shape_cast %26 : vector<32xf32> to vector<1x32xf32>
    %30 = vector.broadcast %29 : vector<1x32xf32> to vector<16x32xf32>
    %31 = arith.addf %28, %30 : vector<16x32xf32>
    %32 = arith.addf %0, %31 : vector<16x32xf32>
    %c3 = arith.constant 3 : index
    %c0_18 = arith.constant 0 : index
    %c0_19 = arith.constant 0 : index
    %33 = vector.load %arg2[%c3, %c0_18, %c0_19] : memref<6x32x32xbf16, #tpu.memory_space<vmem>>, vector<1x32x32xbf16>
    %34 = vector.shape_cast %33 : vector<1x32x32xbf16> to vector<32x32xbf16>
    %c3_20 = arith.constant 3 : index
    %c0_21 = arith.constant 0 : index
    %35 = vector.load %arg3[%c3_20, %c0_21] : memref<6x32xf32, #tpu.memory_space<vmem>>, vector<1x32xf32>
    %36 = vector.shape_cast %35 : vector<1x32xf32> to vector<32xf32>
    %37 = arith.truncf %32 : vector<16x32xf32> to vector<16x32xbf16>
    %cst_22 = arith.constant dense<0.000000e+00> : vector<16x32xf32>
    %38 = tpu.matmul %37, %34, %cst_22 {dimension_numbers = #tpu.dot_dimension_numbers<[1], [0], [0], [1], [0, 0, 1, 1], [], []>} : vector<16x32xbf16>, vector<32x32xbf16>, vector<16x32xf32> -> vector<16x32xf32>
    %39 = vector.shape_cast %36 : vector<32xf32> to vector<1x32xf32>
    %40 = vector.broadcast %39 : vector<1x32xf32> to vector<16x32xf32>
    %41 = arith.addf %38, %40 : vector<16x32xf32>
    %cst_23 = arith.constant 0.000000e+00 : f32
    %42 = vector.broadcast %cst_23 : f32 to vector<16x32xf32>
    %43 = arith.maximumf %41, %42 : vector<16x32xf32>
    %c4 = arith.constant 4 : index
    %c0_24 = arith.constant 0 : index
    %c0_25 = arith.constant 0 : index
    %44 = vector.load %arg2[%c4, %c0_24, %c0_25] : memref<6x32x32xbf16, #tpu.memory_space<vmem>>, vector<1x32x32xbf16>
    %45 = vector.shape_cast %44 : vector<1x32x32xbf16> to vector<32x32xbf16>
    %c4_26 = arith.constant 4 : index
    %c0_27 = arith.constant 0 : index
    %46 = vector.load %arg3[%c4_26, %c0_27] : memref<6x32xf32, #tpu.memory_space<vmem>>, vector<1x32xf32>
    %47 = vector.shape_cast %46 : vector<1x32xf32> to vector<32xf32>
    %48 = arith.truncf %43 : vector<16x32xf32> to vector<16x32xbf16>
    %cst_28 = arith.constant dense<0.000000e+00> : vector<16x32xf32>
    %49 = tpu.matmul %48, %45, %cst_28 {dimension_numbers = #tpu.dot_dimension_numbers<[1], [0], [0], [1], [0, 0, 1, 1], [], []>} : vector<16x32xbf16>, vector<32x32xbf16>, vector<16x32xf32> -> vector<16x32xf32>
    %50 = vector.shape_cast %47 : vector<32xf32> to vector<1x32xf32>
    %51 = vector.broadcast %50 : vector<1x32xf32> to vector<16x32xf32>
    %52 = arith.addf %49, %51 : vector<16x32xf32>
    %cst_29 = arith.constant 0.000000e+00 : f32
    %53 = vector.broadcast %cst_29 : f32 to vector<16x32xf32>
    %54 = arith.maximumf %52, %53 : vector<16x32xf32>
    %c5 = arith.constant 5 : index
    %c0_30 = arith.constant 0 : index
    %c0_31 = arith.constant 0 : index
    %55 = vector.load %arg2[%c5, %c0_30, %c0_31] : memref<6x32x32xbf16, #tpu.memory_space<vmem>>, vector<1x32x32xbf16>
    %56 = vector.shape_cast %55 : vector<1x32x32xbf16> to vector<32x32xbf16>
    %c5_32 = arith.constant 5 : index
    %c0_33 = arith.constant 0 : index
    %57 = vector.load %arg3[%c5_32, %c0_33] : memref<6x32xf32, #tpu.memory_space<vmem>>, vector<1x32xf32>
    %58 = vector.shape_cast %57 : vector<1x32xf32> to vector<32xf32>
    %59 = arith.truncf %54 : vector<16x32xf32> to vector<16x32xbf16>
    %cst_34 = arith.constant dense<0.000000e+00> : vector<16x32xf32>
    %60 = tpu.matmul %59, %56, %cst_34 {dimension_numbers = #tpu.dot_dimension_numbers<[1], [0], [0], [1], [0, 0, 1, 1], [], []>} : vector<16x32xbf16>, vector<32x32xbf16>, vector<16x32xf32> -> vector<16x32xf32>
    %61 = vector.shape_cast %58 : vector<32xf32> to vector<1x32xf32>
    %62 = vector.broadcast %61 : vector<1x32xf32> to vector<16x32xf32>
    %63 = arith.addf %60, %62 : vector<16x32xf32>
    %64 = arith.addf %32, %63 : vector<16x32xf32>
    %cst_35 = arith.constant dense<0.000000e+00> : vector<16xf32>
    %65 = vector.multi_reduction <add>, %64, %cst_35 [1] : vector<16x32xf32> to vector<16xf32>
    %66 = vector.shape_cast %65 : vector<16xf32> to vector<16x1xf32>
    %cst_36 = arith.constant 3.200000e+01 : f32
    %67 = vector.broadcast %cst_36 : f32 to vector<16x1xf32>
    %68 = arith.divf %66, %67 : vector<16x1xf32>
    %69 = arith.mulf %64, %64 : vector<16x32xf32>
    %cst_37 = arith.constant dense<0.000000e+00> : vector<16xf32>
    %70 = vector.multi_reduction <add>, %69, %cst_37 [1] : vector<16x32xf32> to vector<16xf32>
    %71 = vector.shape_cast %70 : vector<16xf32> to vector<16x1xf32>
    %cst_38 = arith.constant 3.200000e+01 : f32
    %72 = vector.broadcast %cst_38 : f32 to vector<16x1xf32>
    %73 = arith.divf %71, %72 : vector<16x1xf32>
    %74 = arith.mulf %68, %68 : vector<16x1xf32>
    %75 = arith.subf %73, %74 : vector<16x1xf32>
    %76 = vector.broadcast %68 : vector<16x1xf32> to vector<16x32xf32>
    %77 = arith.subf %64, %76 : vector<16x32xf32>
    %cst_39 = arith.constant 9.99999974E-6 : f32
    %78 = vector.broadcast %cst_39 : f32 to vector<16x1xf32>
    %79 = arith.addf %75, %78 : vector<16x1xf32>
    %80 = math.rsqrt %79 : vector<16x1xf32>
    %81 = vector.broadcast %80 : vector<16x1xf32> to vector<16x32xf32>
    %82 = arith.mulf %77, %81 : vector<16x32xf32>
    %c0_40 = arith.constant 0 : index
    %c0_41 = arith.constant 0 : index
    %83 = vector.load %arg4[%c0_40, %c0_41] : memref<1x32xf32, #tpu.memory_space<vmem>>, vector<1x32xf32>
    %84 = vector.broadcast %83 : vector<1x32xf32> to vector<16x32xf32>
    %85 = arith.mulf %82, %84 : vector<16x32xf32>
    %c0_42 = arith.constant 0 : index
    %c0_43 = arith.constant 0 : index
    %86 = vector.load %arg5[%c0_42, %c0_43] : memref<1x32xf32, #tpu.memory_space<vmem>>, vector<1x32xf32>
    %87 = vector.broadcast %86 : vector<1x32xf32> to vector<16x32xf32>
    %88 = arith.addf %85, %87 : vector<16x32xf32>
    %c0_44 = arith.constant 0 : index
    %c0_45 = arith.constant 0 : index
    %89 = vector.load %arg6[%c0_44, %c0_45] : memref<16x32xf32, #tpu.memory_space<vmem>>, vector<16x32xf32>
    tpu.vector_store %arg6[%c0_44, %c0_45], %88 {strides = array<i32>} : memref<16x32xf32, #tpu.memory_space<vmem>>, vector<16x32xf32>,
    return
  }
  func.func @transform_0(%arg0: i32) -> (i32, i32) {
    %c0_i32 = arith.constant 0 : i32
    %c0_i32_0 = arith.constant 0 : i32
    return %arg0, %c0_i32 : i32, i32
  }
  func.func @transform_1(%arg0: i32) -> (i32, i32, i32) {
    %c0_i32 = arith.constant 0 : i32
    %c0_i32_0 = arith.constant 0 : i32
    %c0_i32_1 = arith.constant 0 : i32
    %c0_i32_2 = arith.constant 0 : i32
    return %c0_i32, %c0_i32_0, %c0_i32_1 : i32, i32, i32
  }
  func.func @transform_2(%arg0: i32) -> (i32, i32) {
    %c0_i32 = arith.constant 0 : i32
    %c0_i32_0 = arith.constant 0 : i32
    %c0_i32_1 = arith.constant 0 : i32
    return %c0_i32, %c0_i32_0 : i32, i32
  }
  func.func @transform_3(%arg0: i32) -> (i32, i32) {
    %c0_i32 = arith.constant 0 : i32
    %c0_i32_0 = arith.constant 0 : i32
    %c0_i32_1 = arith.constant 0 : i32
    return %c0_i32, %c0_i32_0 : i32, i32
  }
  func.func @transform_4(%arg0: i32) -> (i32, i32) {
    %c0_i32 = arith.constant 0 : i32
    %c0_i32_0 = arith.constant 0 : i32
    %c0_i32_1 = arith.constant 0 : i32
    return %c0_i32, %c0_i32_0 : i32, i32
  }
  func.func @transform_5(%arg0: i32) -> (i32, i32) {
    %c0_i32 = arith.constant 0 : i32
    %c0_i32_0 = arith.constant 0 : i32
    return %arg0, %c0_i32 : i32, i32
  }
}

</mosaic_0001>

<llo_original>
// kernel: tpu_custom_call.1
$region0: #{tpu_custom_call.1}
  #allocation0 [shape = 'u32[]', space=smem, size = 0x4, offset = 0x4, fixed_abs, tag = 'smem constant byte address 0x4 - core index']
  #allocation1 [shape = 'u32[72,128]{1,0:T(1,128)}', space=vmem, size = 0x9000, scoped, tag = 'internal scratch']
  %s0 = inlined_call_operand.hbm [shape: f32[16,32], index: 0, kind: input, shape index: {}]
  %s1 = inlined_call_operand.hbm [shape: bf16[6,32,32], index: 1, kind: input, shape index: {}]
  %s2 = inlined_call_operand.hbm [shape: f32[6,32], index: 2, kind: input, shape index: {}]
  %s3 = inlined_call_operand.vmem [shape: f32[1,32], index: 3, kind: input, shape index: {}]
  %s4 = inlined_call_operand.vmem [shape: f32[1,32], index: 4, kind: input, shape index: {}]
  %s5 = inlined_call_operand.hbm [shape: f32[16,32], index: 5, kind: output, shape index: {}]
  %s6 = sld [smem:[#allocation0]]
  $region42: #{tpu_custom_call.1} parent=0
    _
  %s8 = ssub.s32 1, %s6
  %s9 = scalar_select 0, %s8, %s6
  $region1: #{tpu_custom_call.1} parent=0
    #allocation2 [shape = 'u8[8192]{0}', space=vmem, size = 0x2000, scoped, tag = 'input window, operand 0, single buffered']
    #allocation3 [shape = 's32[1]{0}', space=sflag, size = 0x4, scoped, tag = 'scoped memory for tpu_custom_call.1']
    #allocation4 [shape = 's32[1]{0}', space=sflag, size = 0x4, scoped, tag = 'scoped memory for tpu_custom_call.1']
    #allocation5 [shape = 'u8[49152]{0}', space=vmem, size = 0xc000, scoped, tag = 'input window, operand 1, single buffered']
    #allocation6 [shape = 's32[1]{0}', space=sflag, size = 0x4, scoped, tag = 'scoped memory for tpu_custom_call.1']
    #allocation7 [shape = 'u8[4096]{0}', space=vmem, size = 0x1000, scoped, tag = 'input window, operand 2, single buffered']
    #allocation8 [shape = 'u8[8192]{0}', space=vmem, size = 0x2000, scoped, tag = 'output window, operand 0, single buffered']
    %10 = vsyncpa [#allocation3], 0
    %11 = vsyncpa [#allocation6], 0
    %12 = vsyncpa [#allocation4], 0
    // Predicated region
    $region2: #{tpu_custom_call.1} parent=1 // pred_check
      _
    $region3: #{tpu_custom_call.1} parent=1 // pred_check_branch
      %14 = sbr.rel (0) target = $region5
    $region4: #{tpu_custom_call.1} parent=1 // pred_region
      %16 = vsyncadd [#allocation3], 0
      %s17 = sshll.u32 %s0, 4
      %s18 = int_to_ptr.hbm [resolvable:$true] %s17
      %s19 = sshll.u32 [#allocation2], 4
      %s20 = int_to_ptr.vmem [resolvable:$true] %s19
      %25 = dma.hbm_to_vmem [thread:$0]  %s18, 256, %s20, [#allocation3], 128, 128, 8
    $region5: #{tpu_custom_call.1} parent=1 // pred_fallthru
      _
    // Predicated region
    $region6: #{tpu_custom_call.1} parent=1 // pred_check
      _
    $region7: #{tpu_custom_call.1} parent=1 // pred_check_branch
      %27 = sbr.rel (0) target = $region9
    $region8: #{tpu_custom_call.1} parent=1 // pred_region
      %29 = vsyncadd [#allocation6], 0
      %s30 = sshll.u32 %s1, 4
      %s31 = int_to_ptr.hbm [resolvable:$true] %s30
      %s32 = sshll.u32 [#allocation5], 4
      %s33 = int_to_ptr.vmem [resolvable:$true] %s32
      %38 = dma.hbm_to_vmem [thread:$0]  %s31, 1536, %s33, [#allocation6], 64, 64, 4
    $region9: #{tpu_custom_call.1} parent=1 // pred_fallthru
      _
    // Predicated region
    $region10: #{tpu_custom_call.1} parent=1 // pred_check
      _
    $region11: #{tpu_custom_call.1} parent=1 // pred_check_branch
      %40 = sbr.rel (0) target = $region13
    $region12: #{tpu_custom_call.1} parent=1 // pred_region
      %42 = vsyncadd [#allocation6], 0
      %s44 = sshll.u32 %s2, 4
      %s45 = int_to_ptr.hbm [resolvable:$true] %s44
      %s46 = sshll.u32 [#allocation7], 4
      %s47 = int_to_ptr.vmem [resolvable:$true] %s46
      %49 = dma.hbm_to_vmem [thread:$0]  %s45, 128, %s47, [#allocation6]
    $region13: #{tpu_custom_call.1} parent=1 // pred_fallthru
      _
    // Predicated region
    $region14: #{tpu_custom_call.1} parent=1 // pred_check
      _
    $region15: #{tpu_custom_call.1} parent=1 // pred_check_branch
      %51 = sbr.rel (0) target = $region17
    $region16: #{tpu_custom_call.1} parent=1 // pred_region
      _
    $region17: #{tpu_custom_call.1} parent=1 // pred_fallthru
      _
    // Predicated region
    $region18: #{tpu_custom_call.1} parent=1 // pred_check
      _
    $region19: #{tpu_custom_call.1} parent=1 // pred_check_branch
      %53 = sbr.rel (0) target = $region21
    $region20: #{tpu_custom_call.1} parent=1 // pred_region
      _
    $region21: #{tpu_custom_call.1} parent=1 // pred_fallthru
      _
    // Predicated region
    $region22: #{tpu_custom_call.1} parent=1 // pred_check
      _
    $region23: #{tpu_custom_call.1} parent=1 // pred_check_branch
      %55 = sbr.rel (0) target = $region25
    $region24: #{tpu_custom_call.1} parent=1 // pred_region
      %57 = dma.done [#allocation3], 256
    $region25: #{tpu_custom_call.1} parent=1 // pred_fallthru
      _
    // Predicated region
    $region26: #{tpu_custom_call.1} parent=1 // pred_check
      _
    $region27: #{tpu_custom_call.1} parent=1 // pred_check_branch
      %59 = sbr.rel (0) target = $region29
    $region28: #{tpu_custom_call.1} parent=1 // pred_region
      %61 = dma.done [#allocation6], 1536
    $region29: #{tpu_custom_call.1} parent=1 // pred_fallthru
      _
    // Predicated region
    $region30: #{tpu_custom_call.1} parent=1 // pred_check
      _
    $region31: #{tpu_custom_call.1} parent=1 // pred_check_branch
      %63 = sbr.rel (0) target = $region33
    $region32: #{tpu_custom_call.1} parent=1 // pred_region
      %65 = dma.done [#allocation6], 128
    $region33: #{tpu_custom_call.1} parent=1 // pred_fallthru
      _
    %v67 = vld [vmem:[#allocation2] sm:$0xff]
    %v68 = vld [vmem:[#allocation2 + $0x8] sm:$0xff]
    %v69 = vld [vmem:[#allocation5] sm:$0xf]
    %v70 = vld [vmem:[#allocation5 + $0x4] sm:$0xf]
    %v71 = vld [vmem:[#allocation5 + $0x8] sm:$0xf]
    %v72 = vld [vmem:[#allocation5 + $0xc] sm:$0xf]
    %v73 = vld [vmem:[#allocation7] sm:$0x1]
    %v74 = vpack.c.bf16 %v68, %v67
    %v75 = vperm.slane %v73, 0
    %v80 = vunpack.c.l.b16 %v69
    %v81 = vunpack.c.l.b16 %v70
    %v82 = vunpack.c.l.b16 %v71
    %v83 = vunpack.c.l.b16 %v72
    %v84 = vpack.c.b16 %v81, %v80
    %v85 = vpack.c.b16 %v83, %v82
    %vm88 = vcmask 261120
    %v90 = vsel %vm88, %v74, 0
    %92 = vmatpush.bf16.msra.mxu0 0
    %93 = vmatpush.bf16.msra.mxu0 0
    %94 = vmatpush.bf16.msra.mxu0 0
    %95 = vmatpush.bf16.msra.mxu0 0
    %96 = vmatpush.bf16.msra.mxu0 0
    %97 = vmatpush.bf16.msra.mxu0 0
    %98 = vmatpush.bf16.msra.mxu0 %v85
    %99 = vmatpush.bf16.msra.mxu0 %v84
    %100 = vmatmul.bf16.gmra.mxu0 %v90
    %v101 = vpop.f32.mrf.mxu0
    %v102 = vadd.f32 %v75, %v101
    %v103 = vpop.f32.mrf.mxu0
    %v104 = vadd.f32 %v75, %v103
    %105 = vdwg.mxu0
    %v106 = vmax.f32 %v102, 0.0
    %v107 = vmax.f32 %v104, 0.0
    %s108 = scalar_lea.vmem [#allocation5], 16
    %v109 = vld [vmem:[%s108] sm:$0xf]
    %v110 = vld [vmem:[%s108 + $0x4] sm:$0xf]
    %v111 = vld [vmem:[%s108 + $0x8] sm:$0xf]
    %v112 = vld [vmem:[%s108 + $0xc] sm:$0xf]
    %v113 = vld [vmem:[#allocation7 + $0x1] sm:$0x1]
    %v114 = vpack.c.bf16 %v107, %v106
    %v115 = vperm.slane %v113, 0
    %v120 = vunpack.c.l.b16 %v109
    %v121 = vunpack.c.l.b16 %v110
    %v122 = vunpack.c.l.b16 %v111
    %v123 = vunpack.c.l.b16 %v112
    %v124 = vpack.c.b16 %v121, %v120
    %v125 = vpack.c.b16 %v123, %v122
    %v129 = vsel %vm88, %v114, 0
    %131 = vmatpush.bf16.msra.mxu0 0
    %132 = vmatpush.bf16.msra.mxu0 0
    %133 = vmatpush.bf16.msra.mxu0 0
    %134 = vmatpush.bf16.msra.mxu0 0
    %135 = vmatpush.bf16.msra.mxu0 0
    %136 = vmatpush.bf16.msra.mxu0 0
    %137 = vmatpush.bf16.msra.mxu0 %v125
    %138 = vmatpush.bf16.msra.mxu0 %v124
    %139 = vmatmul.bf16.gmra.mxu0 %v129
    %v140 = vpop.f32.mrf.mxu0
    %v141 = vadd.f32 %v115, %v140
    %v142 = vpop.f32.mrf.mxu0
    %v143 = vadd.f32 %v115, %v142
    %144 = vdwg.mxu0
    %v145 = vmax.f32 %v141, 0.0
    %v146 = vmax.f32 %v143, 0.0
    %s147 = scalar_lea.vmem [#allocation5], 32
    %v148 = vld [vmem:[%s147] sm:$0xf]
    %v149 = vld [vmem:[%s147 + $0x4] sm:$0xf]
    %v150 = vld [vmem:[%s147 + $0x8] sm:$0xf]
    %v151 = vld [vmem:[%s147 + $0xc] sm:$0xf]
    %v152 = vld [vmem:[#allocation7 + $0x2] sm:$0x1]
    %v153 = vpack.c.bf16 %v146, %v145
    %v154 = vperm.slane %v152, 0
    %v159 = vunpack.c.l.b16 %v148
    %v160 = vunpack.c.l.b16 %v149
    %v161 = vunpack.c.l.b16 %v150
    %v162 = vunpack.c.l.b16 %v151
    %v163 = vpack.c.b16 %v160, %v159
    %v164 = vpack.c.b16 %v162, %v161
    %v168 = vsel %vm88, %v153, 0
    %170 = vmatpush.bf16.msra.mxu0 0
    %171 = vmatpush.bf16.msra.mxu0 0
    %172 = vmatpush.bf16.msra.mxu0 0
    %173 = vmatpush.bf16.msra.mxu0 0
    %174 = vmatpush.bf16.msra.mxu0 0
    %175 = vmatpush.bf16.msra.mxu0 0
    %176 = vmatpush.bf16.msra.mxu0 %v164
    %177 = vmatpush.bf16.msra.mxu0 %v163
    %178 = vmatmul.bf16.gmra.mxu0 %v168
    %v179 = vpop.f32.mrf.mxu0
    %v180 = vadd.f32 %v154, %v179
    %v181 = vpop.f32.mrf.mxu0
    %v182 = vadd.f32 %v154, %v181
    %183 = vdwg.mxu0
    %v184 = vadd.f32 %v67, %v180
    %v185 = vadd.f32 %v68, %v182
    %s186 = scalar_lea.vmem [#allocation5], 48
    %v187 = vld [vmem:[%s186] sm:$0xf]
    %v188 = vld [vmem:[%s186 + $0x4] sm:$0xf]
    %v189 = vld [vmem:[%s186 + $0x8] sm:$0xf]
    %v190 = vld [vmem:[%s186 + $0xc] sm:$0xf]
    %v191 = vld [vmem:[#allocation7 + $0x3] sm:$0x1]
    %v192 = vpack.c.bf16 %v185, %v184
    %v193 = vperm.slane %v191, 0
    %v198 = vunpack.c.l.b16 %v187
    %v199 = vunpack.c.l.b16 %v188
    %v200 = vunpack.c.l.b16 %v189
    %v201 = vunpack.c.l.b16 %v190
    %v202 = vpack.c.b16 %v199, %v198
    %v203 = vpack.c.b16 %v201, %v200
    %v207 = vsel %vm88, %v192, 0
    %209 = vmatpush.bf16.msra.mxu0 0
    %210 = vmatpush.bf16.msra.mxu0 0
    %211 = vmatpush.bf16.msra.mxu0 0
    %212 = vmatpush.bf16.msra.mxu0 0
    %213 = vmatpush.bf16.msra.mxu0 0
    %214 = vmatpush.bf16.msra.mxu0 0
    %215 = vmatpush.bf16.msra.mxu0 %v203
    %216 = vmatpush.bf16.msra.mxu0 %v202
    %217 = vmatmul.bf16.gmra.mxu0 %v207
    %v218 = vpop.f32.mrf.mxu0
    %v219 = vadd.f32 %v193, %v218
    %v220 = vpop.f32.mrf.mxu0
    %v221 = vadd.f32 %v193, %v220
    %222 = vdwg.mxu0
    %v223 = vmax.f32 %v219, 0.0
    %v224 = vmax.f32 %v221, 0.0
    %s225 = scalar_lea.vmem [#allocation5], 64
    %v226 = vld [vmem:[%s225] sm:$0xf]
    %v227 = vld [vmem:[%s225 + $0x4] sm:$0xf]
    %v228 = vld [vmem:[%s225 + $0x8] sm:$0xf]
    %v229 = vld [vmem:[%s225 + $0xc] sm:$0xf]
    %v230 = vld [vmem:[#allocation7 + $0x4] sm:$0x1]
    %v231 = vpack.c.bf16 %v224, %v223
    %v232 = vperm.slane %v230, 0
    %v237 = vunpack.c.l.b16 %v226
    %v238 = vunpack.c.l.b16 %v227
    %v239 = vunpack.c.l.b16 %v228
    %v240 = vunpack.c.l.b16 %v229
    %v241 = vpack.c.b16 %v238, %v237
    %v242 = vpack.c.b16 %v240, %v239
    %v246 = vsel %vm88, %v231, 0
    %248 = vmatpush.bf16.msra.mxu0 0
    %249 = vmatpush.bf16.msra.mxu0 0
    %250 = vmatpush.bf16.msra.mxu0 0
    %251 = vmatpush.bf16.msra.mxu0 0
    %252 = vmatpush.bf16.msra.mxu0 0
    %253 = vmatpush.bf16.msra.mxu0 0
    %254 = vmatpush.bf16.msra.mxu0 %v242
    %255 = vmatpush.bf16.msra.mxu0 %v241
    %256 = vmatmul.bf16.gmra.mxu0 %v246
    %v257 = vpop.f32.mrf.mxu0
    %v258 = vadd.f32 %v232, %v257
    %v259 = vpop.f32.mrf.mxu0
    %v260 = vadd.f32 %v232, %v259
    %261 = vdwg.mxu0
    %v262 = vmax.f32 %v258, 0.0
    %v263 = vmax.f32 %v260, 0.0
    %s264 = scalar_lea.vmem [#allocation5], 80
    %v265 = vld [vmem:[%s264] sm:$0xf]
    %v266 = vld [vmem:[%s264 + $0x4] sm:$0xf]
    %v267 = vld [vmem:[%s264 + $0x8] sm:$0xf]
    %v268 = vld [vmem:[%s264 + $0xc] sm:$0xf]
    %v269 = vld [vmem:[#allocation7 + $0x5] sm:$0x1]
    %v270 = vpack.c.bf16 %v263, %v262
    %v271 = vperm.slane %v269, 0
    %v276 = vunpack.c.l.b16 %v265
    %v277 = vunpack.c.l.b16 %v266
    %v278 = vunpack.c.l.b16 %v267
    %v279 = vunpack.c.l.b16 %v268
    %v280 = vpack.c.b16 %v277, %v276
    %v281 = vpack.c.b16 %v279, %v278
    %v285 = vsel %vm88, %v270, 0
    %287 = vmatpush.bf16.msra.mxu0 0
    %288 = vmatpush.bf16.msra.mxu0 0
    %289 = vmatpush.bf16.msra.mxu0 0
    %290 = vmatpush.bf16.msra.mxu0 0
    %291 = vmatpush.bf16.msra.mxu0 0
    %292 = vmatpush.bf16.msra.mxu0 0
    %293 = vmatpush.bf16.msra.mxu0 %v281
    %294 = vmatpush.bf16.msra.mxu0 %v280
    %295 = vmatmul.bf16.gmra.mxu0 %v285
    %v296 = vpop.f32.mrf.mxu0
    %v297 = vadd.f32 %v271, %v296
    %v298 = vpop.f32.mrf.mxu0
    %v299 = vadd.f32 %v271, %v298
    %300 = vdwg.mxu0
    %v301 = vadd.f32 %v184, %v297
    %v302 = vadd.f32 %v185, %v299
    %v303 = vsel %vm88, %v301, 0.0
    %304 = vadd.xlane.f32.xlu0 %v303
    %v305 = vpop.xlane.xlu0 %304
    %v306 = vsel %vm88, %v302, 0.0
    %307 = vadd.xlane.f32.xlu0 %v306
    %v308 = vpop.xlane.xlu0 %307
    %v309 = vrcp.pop 32.0
    %v310 = vmul.f32 32.0, %v309
    %v311 = vsub.f32 1.0, %v310
    %v312 = vmul.f32 %v309, %v311
    %v313 = vadd.f32 %v309, %v312
    %vm314 = vweird.f32 %v309
    %v315 = vsel %vm314, %v309, %v313
    %v316 = vmul.f32 %v305, %v315
    %v317 = vmul.f32 %v308, %v315
    %v318 = vmul.f32 %v301, %v301
    %v319 = vmul.f32 %v302, %v302
    %v320 = vsel %vm88, %v318, 0.0
    %321 = vadd.xlane.f32.xlu0 %v320
    %v322 = vpop.xlane.xlu0 %321
    %v323 = vsel %vm88, %v319, 0.0
    %324 = vadd.xlane.f32.xlu0 %v323
    %v325 = vpop.xlane.xlu0 %324
    %v326 = vmul.f32 %v322, %v315
    %v327 = vmul.f32 %v325, %v315
    %v328 = vmul.f32 %v316, %v316
    %v329 = vmul.f32 %v317, %v317
    %v330 = vsub.f32 %v326, %v328
    %v331 = vsub.f32 %v327, %v329
    %v332 = vsub.f32 %v301, %v316
    %v333 = vsub.f32 %v302, %v317
    %v334 = vadd.f32 %v330, 1e-05
    %v335 = vadd.f32 %v331, 1e-05
    %v336 = vrsqrt.pop %v334
    %v337 = vmul.f32 %v336, %v334
    %v338 = vmul.f32 %v337, %v336
    %v339 = vmul.f32 0.5, %v338
    %v340 = vsub.f32 1.5, %v339
    %v341 = vmul.f32 %v336, %v340
    %vm342 = vweird.f32 %v334
    %vm343 = vweird.f32 %v336
    %vm344 = vmor %vm342, %vm343
    %v345 = vsel %vm344, %v336, %v341
    %v346 = vrsqrt.pop %v335
    %v347 = vmul.f32 %v346, %v335
    %v348 = vmul.f32 %v347, %v346
    %v349 = vmul.f32 0.5, %v348
    %v350 = vsub.f32 1.5, %v349
    %v351 = vmul.f32 %v346, %v350
    %vm352 = vweird.f32 %v335
    %vm353 = vweird.f32 %v346
    %vm354 = vmor %vm352, %vm353
    %v355 = vsel %vm354, %v346, %v351
    %v356 = vmul.f32 %v332, %v345
    %v357 = vmul.f32 %v333, %v355
    %v358 = vld [vmem:[%s3] sm:$0x1]
    %v360 = vperm.slane %v358, 0
    %v362 = vmul.f32 %v356, %v360
    %v363 = vmul.f32 %v357, %v360
    %v364 = vld [vmem:[%s4] sm:$0x1]
    %v366 = vperm.slane %v364, 0
    %v368 = vadd.f32 %v362, %v366
    %v369 = vadd.f32 %v363, %v366
    %370 = vst.msk [vmem:[#allocation8] sm:$0xff] %vm88, %v368
    %371 = vst.msk [vmem:[#allocation8 + $0x8] sm:$0xff] %vm88, %v369
    // Predicated region
    $region34: #{tpu_custom_call.1} parent=1 // pred_check
      _
    $region35: #{tpu_custom_call.1} parent=1 // pred_check_branch
      %373 = sbr.rel (0) target = $region37
    $region36: #{tpu_custom_call.1} parent=1 // pred_region
      %375 = vsyncadd [#allocation4], 0
      %s376 = sshll.u32 [#allocation8], 4
      %s377 = int_to_ptr.vmem [resolvable:$true] %s376
      %s378 = sshll.u32 %s5, 4
      %s379 = int_to_ptr.hbm [resolvable:$true] %s378
      %384 = dma.vmem_to_hbm [thread:$0]  %s377, 256, %s379, [#allocation4], 128, 128, 8
    $region37: #{tpu_custom_call.1} parent=1 // pred_fallthru
      _
    // Predicated region
    $region38: #{tpu_custom_call.1} parent=1 // pred_check
      _
    $region39: #{tpu_custom_call.1} parent=1 // pred_check_branch
      %386 = sbr.rel (0) target = $region41
    $region40: #{tpu_custom_call.1} parent=1 // pred_region
      %388 = dma.done [#allocation4], 256
    $region41: #{tpu_custom_call.1} parent=1 // pred_fallthru
      _
    %389 = vsyncpa [#allocation3], 1
    %390 = vsyncpa [#allocation6], 1
    %391 = vsyncpa [#allocation4], 1

</llo_original>
